<compile_context>
chip_gen: v5e
topology: v5e:2x2
jax: 0.10.0
libtpu: 0.0.40
codegen_flags: <defaults>
</compile_context>

<pallas_src>
import functools

import jax
import jax.numpy as jnp
from jax.experimental import pallas as pl


def dual_q_kernel(state_ref, wfc_ref, bfc_ref, wheads_ref, bheads_ref, out_ref,
                  *, action_size):
    # Hidden layer: bf16 (B,S)@(S,Hp) on the MXU, f32 accumulate; bias+ReLU in f32.
    h = jnp.dot(state_ref[...], wfc_ref[...], preferred_element_type=jnp.float32)
    h = jnp.maximum(h + bfc_ref[...], 0.0)                       # (B, Hp) f32

    # Fused heads: one bf16 (B,Hp)@(Hp,A+1) matmul replaces separate adv/val matmuls.
    y = jnp.dot(h.astype(wheads_ref.dtype), wheads_ref[...],
                preferred_element_type=jnp.float32)
    y = y + bheads_ref[...]                                      # (B, A+1) f32

    adv = y[:, :action_size]                                     # (B, A)
    val = y[:, action_size:action_size + 1]                      # (B, 1)

    # Global mean over the whole (B, A) advantage block (matches torch .mean()):
    # sum * constant reciprocal -> cross-lane/sublane reduce on XLU + one VPU mul.
    inv_n = 1.0 / (adv.shape[0] * adv.shape[1])
    adv_mean = jnp.sum(adv) * inv_n

    # Single fused store of the dueling combine.
    out_ref[...] = (val + adv - adv_mean).astype(out_ref.dtype)


def init_params(key, state_size, action_size, hidden_dim):
    """Deterministic init mimicking nn.Linear's U(-1/sqrt(fan_in), 1/sqrt(fan_in)).
    Weights stored pre-transposed as (in_features, out_features)."""
    def linear(key, fan_in, fan_out):
        kw, kb = jax.random.split(key)
        bound = 1.0 / jnp.sqrt(fan_in)
        w = jax.random.uniform(kw, (fan_in, fan_out), jnp.float32, -bound, bound)
        b = jax.random.uniform(kb, (1, fan_out), jnp.float32, -bound, bound)
        return w, b

    k1, k2, k3 = jax.random.split(key, 3)
    wfc, bfc = linear(k1, state_size, hidden_dim)
    wadv, badv = linear(k2, hidden_dim, action_size)
    wval, bval = linear(k3, hidden_dim, 1)
    return {"wfc": wfc, "bfc": bfc, "wadv": wadv, "badv": badv,
            "wval": wval, "bval": bval}


def prepare_params(params, lane=128):
    """One-time host-side packing: fuse heads, zero-pad hidden dim to a multiple of
    128 lanes, cast matmul operands to bf16 (biases stay f32)."""
    wfc, bfc = params["wfc"], params["bfc"]           # (S, H), (1, H)
    wadv, badv = params["wadv"], params["badv"]       # (H, A), (1, A)
    wval, bval = params["wval"], params["bval"]       # (H, 1), (1, 1)

    H = wfc.shape[1]
    Hp = ((H + lane - 1) // lane) * lane
    pad = Hp - H

    wfc_p = jnp.pad(wfc, ((0, 0), (0, pad)))
    bfc_p = jnp.pad(bfc, ((0, 0), (0, pad)))
    w_heads = jnp.pad(jnp.concatenate([wadv, wval], axis=1), ((0, pad), (0, 0)))
    b_heads = jnp.concatenate([badv, bval], axis=1)

    return {
        "wfc": wfc_p.astype(jnp.bfloat16),        # (S, Hp)  bf16
        "bfc": bfc_p.astype(jnp.float32),         # (1, Hp)  f32
        "w_heads": w_heads.astype(jnp.bfloat16),  # (Hp, A+1) bf16
        "b_heads": b_heads.astype(jnp.float32),   # (1, A+1) f32
        "action_size": int(wadv.shape[1]),
    }


def dual_q_forward(state, prepped):
    """state: (B, state_size) f32. prepped: output of prepare_params."""
    wfc, bfc = prepped["wfc"], prepped["bfc"]
    w_heads, b_heads = prepped["w_heads"], prepped["b_heads"]
    A = prepped["action_size"]
    B = state.shape[0]

    state_bf16 = state.astype(jnp.bfloat16)

    full = lambda shape: pl.BlockSpec(shape, lambda: (0,) * len(shape))
    kernel = functools.partial(dual_q_kernel, action_size=A)

    return pl.pallas_call(
        kernel,
        out_shape=jax.ShapeDtypeStruct((B, A), jnp.float32),
        grid=(),  # single invocation: global adv-mean couples all batch rows
        in_specs=[
            full(state_bf16.shape),
            full(wfc.shape), full(bfc.shape),
            full(w_heads.shape), full(b_heads.shape),
        ],
        out_specs=full((B, A)),
    )(state_bf16, wfc, bfc, w_heads, b_heads)


def reference_forward_f32(state, params):
    """Pure-JAX f32 reference reproducing the PyTorch semantics exactly."""
    h = jnp.maximum(state @ params["wfc"] + params["bfc"], 0.0)
    adv = h @ params["wadv"] + params["badv"]
    val = h @ params["wval"] + params["bval"]
    return val + adv - jnp.mean(adv)


def reference_forward_bf16(state, prepped):
    """Pure-JAX reference mirroring the kernel's bf16-operand / f32-accumulate math."""
    s = state.astype(jnp.bfloat16).astype(jnp.float32)
    h = jnp.maximum(s @ prepped["wfc"].astype(jnp.float32) + prepped["bfc"], 0.0)
    hb = h.astype(jnp.bfloat16).astype(jnp.float32)
    y = hb @ prepped["w_heads"].astype(jnp.float32) + prepped["b_heads"]
    A = prepped["action_size"]
    adv, val = y[:, :A], y[:, A:A + 1]
    return val + adv - jnp.mean(adv)


if __name__ == "__main__":
    batch, state_size, action_size, hidden_dim = 4, 16, 8, 32

    key = jax.random.PRNGKey(0)
    k_params, k_state = jax.random.split(key)
    params = init_params(k_params, state_size, action_size, hidden_dim)
    state = jax.random.normal(k_state, (batch, state_size), jnp.float32)

    prepped = prepare_params(params)
    out = jax.block_until_ready(dual_q_forward(state, prepped))
    assert out.shape == (batch, action_size)

    # Tight check vs. a reference that mirrors the kernel's bf16 quantization.
    ref_bf16 = reference_forward_bf16(state, prepped)
    assert jnp.allclose(out, ref_bf16, atol=1e-4, rtol=1e-4), \
        "mismatch vs bf16-mirrored reference"

    # Loose sanity check vs. the exact f32 PyTorch-equivalent semantics
    # (difference is only bf16 weight/activation quantization).
    ref_f32 = reference_forward_f32(state, params)
    assert jnp.allclose(out, ref_f32, atol=5e-2, rtol=5e-2), \
        "mismatch vs pure-f32 reference"

    print("KERNEL_OK")
</pallas_src>

<mosaic_0001>
module attributes {stable_mosaic.version = 11 : i64} {
  func.func @dual_q_kernel(%arg0: memref<4x16xbf16, #tpu.memory_space<vmem>>, %arg1: memref<16x128xbf16, #tpu.memory_space<vmem>>, %arg2: memref<1x128xf32, #tpu.memory_space<vmem>>, %arg3: memref<128x9xbf16, #tpu.memory_space<vmem>>, %arg4: memref<1x9xf32, #tpu.memory_space<vmem>>, %arg5: memref<4x8xf32, #tpu.memory_space<vmem>>) attributes {dimension_semantics = [], scalar_prefetch = 0 : i64, scratch_operands = 0 : i64, tpu.core_type = #tpu.core_type<tc>} {
    %c0 = arith.constant 0 : index
    %c0_0 = arith.constant 0 : index
    %0 = vector.load %arg0[%c0, %c0_0] : memref<4x16xbf16, #tpu.memory_space<vmem>>, vector<4x16xbf16>
    %c0_1 = arith.constant 0 : index
    %c0_2 = arith.constant 0 : index
    %1 = vector.load %arg1[%c0_1, %c0_2] : memref<16x128xbf16, #tpu.memory_space<vmem>>, vector<16x128xbf16>
    %cst = arith.constant dense<0.000000e+00> : vector<4x128xf32>
    %2 = tpu.matmul %0, %1, %cst {dimension_numbers = #tpu.dot_dimension_numbers<[1], [0], [0], [1], [0, 0, 1, 1], [], []>} : vector<4x16xbf16>, vector<16x128xbf16>, vector<4x128xf32> -> vector<4x128xf32>
    %c0_3 = arith.constant 0 : index
    %c0_4 = arith.constant 0 : index
    %3 = vector.load %arg2[%c0_3, %c0_4] : memref<1x128xf32, #tpu.memory_space<vmem>>, vector<1x128xf32>
    %4 = vector.broadcast %3 : vector<1x128xf32> to vector<4x128xf32>
    %5 = arith.addf %2, %4 : vector<4x128xf32>
    %cst_5 = arith.constant 0.000000e+00 : f32
    %6 = vector.broadcast %cst_5 : f32 to vector<4x128xf32>
    %7 = arith.maximumf %5, %6 : vector<4x128xf32>
    %8 = arith.truncf %7 : vector<4x128xf32> to vector<4x128xbf16>
    %c0_6 = arith.constant 0 : index
    %c0_7 = arith.constant 0 : index
    %9 = vector.load %arg3[%c0_6, %c0_7] : memref<128x9xbf16, #tpu.memory_space<vmem>>, vector<128x9xbf16>
    %cst_8 = arith.constant dense<0.000000e+00> : vector<4x9xf32>
    %10 = tpu.matmul %8, %9, %cst_8 {dimension_numbers = #tpu.dot_dimension_numbers<[1], [0], [0], [1], [0, 0, 1, 1], [], []>} : vector<4x128xbf16>, vector<128x9xbf16>, vector<4x9xf32> -> vector<4x9xf32>
    %c0_9 = arith.constant 0 : index
    %c0_10 = arith.constant 0 : index
    %11 = vector.load %arg4[%c0_9, %c0_10] : memref<1x9xf32, #tpu.memory_space<vmem>>, vector<1x9xf32>
    %12 = vector.broadcast %11 : vector<1x9xf32> to vector<4x9xf32>
    %13 = arith.addf %10, %12 : vector<4x9xf32>
    %14 = vector.extract_strided_slice %13 {offsets = [0, 0], sizes = [4, 8], strides = [1, 1]} : vector<4x9xf32> to vector<4x8xf32>
    %15 = vector.extract_strided_slice %13 {offsets = [0, 8], sizes = [4, 1], strides = [1, 1]} : vector<4x9xf32> to vector<4x1xf32>
    %16 = vector.shape_cast %14 : vector<4x8xf32> to vector<1x4x8xf32>
    %cst_11 = arith.constant dense<0.000000e+00> : vector<1xf32>
    %17 = vector.multi_reduction <add>, %16, %cst_11 [1, 2] : vector<1x4x8xf32> to vector<1xf32>
    %18 = vector.shape_cast %17 : vector<1xf32> to vector<1x1x1xf32>
    %19 = vector.extract %18[0, 0, 0] : f32 from vector<1x1x1xf32>
    %cst_12 = arith.constant 3.125000e-02 : f32
    %20 = arith.mulf %19, %cst_12 : f32
    %21 = vector.broadcast %15 : vector<4x1xf32> to vector<4x8xf32>
    %22 = arith.addf %21, %14 : vector<4x8xf32>
    %23 = vector.broadcast %20 : f32 to vector<4x8xf32>
    %24 = arith.subf %22, %23 : vector<4x8xf32>
    %c0_13 = arith.constant 0 : index
    %c0_14 = arith.constant 0 : index
    %25 = vector.load %arg5[%c0_13, %c0_14] : memref<4x8xf32, #tpu.memory_space<vmem>>, vector<4x8xf32>
    tpu.vector_store %arg5[%c0_13, %c0_14], %24 {strides = array<i32>} : memref<4x8xf32, #tpu.memory_space<vmem>>, vector<4x8xf32>,
    return
  }
}

</mosaic_0001>

<llo_original>
// kernel: tpu_custom_call.1
$region0: #{tpu_custom_call.1}
  #allocation0 [shape = 'u32[]', space=smem, size = 0x4, offset = 0x4, fixed_abs, tag = 'smem constant byte address 0x4 - core index']
  #allocation1 [shape = 'u32[72,128]{1,0:T(1,128)}', space=vmem, size = 0x9000, scoped, tag = 'internal scratch']
  %s0 = inlined_call_operand.vmem [shape: bf16[4,16], index: 0, kind: input, shape index: {}]
  %s1 = inlined_call_operand.vmem [shape: bf16[16,128], index: 1, kind: input, shape index: {}]
  %s2 = inlined_call_operand.vmem [shape: f32[1,128], index: 2, kind: input, shape index: {}]
  %s3 = inlined_call_operand.vmem [shape: bf16[128,9], index: 3, kind: input, shape index: {}]
  %s4 = inlined_call_operand.vmem [shape: f32[1,9], index: 4, kind: input, shape index: {}]
  %s5 = inlined_call_operand.hbm [shape: f32[4,8], index: 5, kind: output, shape index: {}]
  %s6 = sld [smem:[#allocation0]]
  $region30: #{tpu_custom_call.1} parent=0
    _
  %s8 = ssub.s32 1, %s6
  %s9 = scalar_select 0, %s8, %s6
  $region1: #{tpu_custom_call.1} parent=0
    #allocation2 [shape = 'u8[2048]{0}', space=vmem, size = 0x800, scoped, tag = 'output window, operand 0, single buffered']
    #allocation3 [shape = 's32[1]{0}', space=sflag, size = 0x4, scoped, tag = 'scoped memory for tpu_custom_call.1']
    %10 = vsyncpa [#allocation3], 0
    // Predicated region
    $region2: #{tpu_custom_call.1} parent=1 // pred_check
      _
    $region3: #{tpu_custom_call.1} parent=1 // pred_check_branch
      %12 = sbr.rel (0) target = $region5
    $region4: #{tpu_custom_call.1} parent=1 // pred_region
      _
    $region5: #{tpu_custom_call.1} parent=1 // pred_fallthru
      _
    // Predicated region
    $region6: #{tpu_custom_call.1} parent=1 // pred_check
      _
    $region7: #{tpu_custom_call.1} parent=1 // pred_check_branch
      %14 = sbr.rel (0) target = $region9
    $region8: #{tpu_custom_call.1} parent=1 // pred_region
      _
    $region9: #{tpu_custom_call.1} parent=1 // pred_fallthru
      _
    // Predicated region
    $region10: #{tpu_custom_call.1} parent=1 // pred_check
      _
    $region11: #{tpu_custom_call.1} parent=1 // pred_check_branch
      %16 = sbr.rel (0) target = $region13
    $region12: #{tpu_custom_call.1} parent=1 // pred_region
      _
    $region13: #{tpu_custom_call.1} parent=1 // pred_fallthru
      _
    // Predicated region
    $region14: #{tpu_custom_call.1} parent=1 // pred_check
      _
    $region15: #{tpu_custom_call.1} parent=1 // pred_check_branch
      %18 = sbr.rel (0) target = $region17
    $region16: #{tpu_custom_call.1} parent=1 // pred_region
      _
    $region17: #{tpu_custom_call.1} parent=1 // pred_fallthru
      _
    // Predicated region
    $region18: #{tpu_custom_call.1} parent=1 // pred_check
      _
    $region19: #{tpu_custom_call.1} parent=1 // pred_check_branch
      %20 = sbr.rel (0) target = $region21
    $region20: #{tpu_custom_call.1} parent=1 // pred_region
      _
    $region21: #{tpu_custom_call.1} parent=1 // pred_fallthru
      _
    %v22 = vld [vmem:[%s0] sm:$0x3]
    %v23 = vld [vmem:[%s1] sm:$0xf]
    %v24 = vld [vmem:[%s1 + $0x4] sm:$0xf]
    %v25 = vld [vmem:[%s2] sm:$0x1]
    %v27 = vperm.slane %v25, 0
    %v31 = vunpack.c.l.b16 %v23
    %v32 = vunpack.c.l.b16 %v24
    %v33 = vpack.c.b16 %v32, %v31
    %vm35 = vcmask 130048
    %v37 = vsel %vm35, %v22, 0
    %39 = vmatpush.bf16.msra.mxu0 0
    %40 = vmatpush.bf16.msra.mxu0 0
    %41 = vmatpush.bf16.msra.mxu0 0
    %42 = vmatpush.bf16.msra.mxu0 0
    %43 = vmatpush.bf16.msra.mxu0 0
    %44 = vmatpush.bf16.msra.mxu0 0
    %45 = vmatpush.bf16.msra.mxu0 0
    %46 = vmatpush.bf16.msra.mxu0 %v33
    %47 = vmatmul.bf16.gmra.mxu0 %v37
    %v48 = vpop.f32.mrf.mxu0
    %v49 = vadd.f32 %v27, %v48
    %v50 = vpop.f32.mrf.mxu0
    %51 = vdwg.mxu0
    %v52 = vmax.f32 %v49, 0.0
    %v53 = vpack.c.bf16 %v52, %v52
    %v54 = vld [vmem:[%s3] sm:$0xf]
    %v55 = vld [vmem:[%s3 + $0x4] sm:$0xf]
    %v56 = vld [vmem:[%s3 + $0x8] sm:$0xf]
    %v57 = vld [vmem:[%s3 + $0xc] sm:$0xf]
    %v58 = vld [vmem:[%s3 + $0x10] sm:$0xf]
    %v59 = vld [vmem:[%s3 + $0x14] sm:$0xf]
    %v60 = vld [vmem:[%s3 + $0x18] sm:$0xf]
    %v61 = vld [vmem:[%s3 + $0x1c] sm:$0xf]
    %v62 = vld [vmem:[%s3 + $0x20] sm:$0xf]
    %v63 = vld [vmem:[%s3 + $0x24] sm:$0xf]
    %v64 = vld [vmem:[%s3 + $0x28] sm:$0xf]
    %v65 = vld [vmem:[%s3 + $0x2c] sm:$0xf]
    %v66 = vld [vmem:[%s3 + $0x30] sm:$0xf]
    %v67 = vld [vmem:[%s3 + $0x34] sm:$0xf]
    %v68 = vld [vmem:[%s3 + $0x38] sm:$0xf]
    %v69 = vld [vmem:[%s3 + $0x3c] sm:$0xf]
    %v70 = vld [vmem:[%s4] sm:$0x1]
    %v72 = vperm.slane %v70, 0
    %v90 = vunpack.c.l.b16 %v54
    %v91 = vunpack.c.l.b16 %v55
    %v92 = vunpack.c.l.b16 %v56
    %v93 = vunpack.c.l.b16 %v57
    %v94 = vunpack.c.l.b16 %v58
    %v95 = vunpack.c.l.b16 %v59
    %v96 = vunpack.c.l.b16 %v60
    %v97 = vunpack.c.l.b16 %v61
    %v98 = vunpack.c.l.b16 %v62
    %v99 = vunpack.c.l.b16 %v63
    %v100 = vunpack.c.l.b16 %v64
    %v101 = vunpack.c.l.b16 %v65
    %v102 = vunpack.c.l.b16 %v66
    %v103 = vunpack.c.l.b16 %v67
    %v104 = vunpack.c.l.b16 %v68
    %v105 = vunpack.c.l.b16 %v69
    %v106 = vpack.c.b16 %v91, %v90
    %v107 = vpack.c.b16 %v93, %v92
    %v108 = vpack.c.b16 %v95, %v94
    %v109 = vpack.c.b16 %v97, %v96
    %v110 = vpack.c.b16 %v99, %v98
    %v111 = vpack.c.b16 %v101, %v100
    %v112 = vpack.c.b16 %v103, %v102
    %v113 = vpack.c.b16 %v105, %v104
    %122 = vmatpush.bf16.msra.mxu0 %v113
    %123 = vmatpush.bf16.msra.mxu0 %v112
    %124 = vmatpush.bf16.msra.mxu0 %v111
    %125 = vmatpush.bf16.msra.mxu0 %v110
    %126 = vmatpush.bf16.msra.mxu0 %v109
    %127 = vmatpush.bf16.msra.mxu0 %v108
    %128 = vmatpush.bf16.msra.mxu0 %v107
    %129 = vmatpush.bf16.msra.mxu0 %v106
    %130 = vmatmul.bf16.gmra.mxu0 %v53
    %v131 = vpop.f32.mrf.mxu0
    %v132 = vadd.f32 %v72, %v131
    %v133 = vpop.f32.mrf.mxu0
    %134 = vdwg.mxu0
    %vm135 = vcmask 60416
    %v136 = vsel %vm135, %v132, 0.0
    %137 = vadd.xlane.f32.xlu0 %v136
    %v138 = vpop.xlane.xlu0 %137
    %v139 = vrot.slane %v138, 4
    %v140 = vadd.f32 %v138, %v139
    %v141 = vrot.slane %v140, 2
    %v142 = vadd.f32 %v140, %v141
    %v143 = vrot.slane %v142, 1
    %v144 = vadd.f32 %v142, %v143
    %s145 = vtos %v144
    %s146 = smul.f32 %s145, 0.03125
    %148 = vset.pattern.permute.xlu0 8
    %149 = vperm.xlu0 %148, %v132
    %v150 = vpop.permute.xlu0 %149
    %v152 = vadd.f32 %v150, %v132
    %v153 = vstv %s146
    %v154 = vsub.f32 %v152, %v153
    %155 = vst.msk [vmem:[#allocation2] sm:$0xf] %vm135, %v154
    // Predicated region
    $region22: #{tpu_custom_call.1} parent=1 // pred_check
      _
    $region23: #{tpu_custom_call.1} parent=1 // pred_check_branch
      %157 = sbr.rel (0) target = $region25
    $region24: #{tpu_custom_call.1} parent=1 // pred_region
      %159 = vsyncadd [#allocation3], 0
      %s161 = sshll.u32 [#allocation2], 4
      %s162 = int_to_ptr.vmem [resolvable:$true] %s161
      %s163 = sshll.u32 %s5, 4
      %s164 = int_to_ptr.hbm [resolvable:$true] %s163
      %166 = dma.vmem_to_hbm [thread:$0]  %s162, 64, %s164, [#allocation3]
    $region25: #{tpu_custom_call.1} parent=1 // pred_fallthru
      _
    // Predicated region
    $region26: #{tpu_custom_call.1} parent=1 // pred_check
      _
    $region27: #{tpu_custom_call.1} parent=1 // pred_check_branch
      %168 = sbr.rel (0) target = $region29
    $region28: #{tpu_custom_call.1} parent=1 // pred_region
      %170 = dma.done [#allocation3], 64
    $region29: #{tpu_custom_call.1} parent=1 // pred_fallthru
      _
    %171 = vsyncpa [#allocation3], 1

</llo_original>
